<compile_context>
chip_gen: v6e
topology: v6e:2x2x1
jax: 0.10.0
libtpu: 0.0.40
codegen_flags: <defaults>
</compile_context>

<pallas_src>
import functools

import jax
import jax.numpy as jnp
from jax.experimental import pallas as pl
from jax.experimental.pallas import tpu as pltpu

_PAD = 2  # Conv2d padding=(2, 0) on the sequence axis


def _round_up(n, m):
    return (n + m - 1) // m * m


def _pick_tiling(B, L, D, f_max, l_out_p, lpad, con_p, c_p):
    """Pick (batch_tile, padded_batch, vmem_limit_bytes).

    Rules: (a) >= 2 grid steps whenever B >= 16 so the "parallel" batch axis can
    shard across v7x's two TensorCores; (b) per-step working set must fit a
    conservative VMEM budget (v7x: 64 MiB physical); (c) the tile is a multiple
    of 8 (block-shape rule) unless it equals the whole batch.
    """
    def work_bytes(tb):
        x_blk = tb * L * D * 2 * 2                   # bf16 input, double-buffered
        out_blk = tb * c_p * 4 * 2                   # f32 output, double-buffered
        xp = tb * lpad * D * 2                       # padded-sequence scratch
        live = 2 * tb * l_out_p * con_p * 4          # f32 acc + y live values / spill
        weights = 2 * (f_max * D * con_p * 2 + con_p * 4
                       + l_out_p * con_p * 4 + con_p * c_p * 4 + c_p * 4)
        return x_blk + out_blk + xp + live + weights

    budget = 40 * 1024 * 1024                        # headroom inside v7x's 64 MiB
    if B < 16:
        tb = B                                       # block == full dim is always legal
    else:
        max_tb = max(8, (_round_up(B, 8) // 2) // 8 * 8)   # >= 2 grid steps
        tb = 8
        for cand in (256, 128, 64, 32, 16, 8):
            if cand <= max_tb and work_bytes(cand) <= budget:
                tb = cand
                break
    b_pad = _round_up(B, tb)
    vmem_limit = int(min(48 * 1024 * 1024,
                         max(32 * 1024 * 1024, 2 * work_bytes(tb))))
    return tb, b_pad, vmem_limit


def _textcnn_kernel(x_ref, wm_ref, bm_ref, mask_ref, fcw_ref, fcb_ref, out_ref,
                    xp_ref, *, f_max, l_out_p):
    TB, L, D = x_ref.shape
    lpad = xp_ref.shape[1]
    con_p = wm_ref.shape[1]

    # 1) Build the zero-padded sequence in VMEM.  Only the pad rows are
    #    zero-filled; the real rows are stored exactly once (input is already bf16).
    xp_ref[:, :_PAD, :] = jnp.zeros((TB, _PAD, D), xp_ref.dtype)
    xp_ref[:, _PAD + L:, :] = jnp.zeros((TB, lpad - _PAD - L, D), xp_ref.dtype)
    xp_ref[:, _PAD:_PAD + L, :] = x_ref[...]

    # 2) Merged convolutions as f_max K-accumulated MXU matmuls (no im2col
    #    materialization): tap j contributes (TB*l_out_p, D) @ (D, Co*nk_padded).
    acc = jnp.zeros((TB * l_out_p, con_p), jnp.float32)
    for j in range(f_max):
        taps = xp_ref[:, j:j + l_out_p, :].reshape(TB * l_out_p, D)
        acc = acc + jnp.dot(taps, wm_ref[j * D:(j + 1) * D, :],
                            preferred_element_type=jnp.float32)

    # 3) bias + ReLU + precomputed validity mask + global max-pool.  Forcing
    #    invalid positions to 0 after ReLU never changes the max (valid y >= 0).
    y = acc.reshape(TB, l_out_p, con_p) + bm_ref[...]
    y = jnp.maximum(y, 0.0) * mask_ref[...]
    feat = jnp.max(y, axis=1)                        # (TB, con_p), torch.cat order

    # 4) classifier, kept in f32 (FLOP-trivial, tighter logits).
    # TODO(synk): dropout is an inference-mode identity (PyTorch eval semantics).
    out_ref[...] = jnp.dot(feat, fcw_ref[...],
                           preferred_element_type=jnp.float32) + fcb_ref[...]


def prepare_textcnn_params(conv_params, fc_w, fc_b, kernel_sizes, seq_len):
    """One-time parameter re-layout (hoisted out of the hot path).

    conv_params: list of (w, b) with w: (Co, f, D)  (Conv2d weight, Ci squeezed).
    Returns:
      wm   (f_max*D, con_p) bf16  merged conv weights, taps stacked along K,
                                  output channels zero-padded to a multiple of 128
      bm   (1, con_p)       f32   merged conv bias (zero in padded columns)
      mask (l_out_p, con_p) f32   1.0 for valid sequence positions, else 0.0
      fcw  (con_p, c_p)     f32   FC weight, rows/cols zero-padded to 128 multiples
      fcb  (1, c_p)         f32   FC bias (zero in padded columns)
    """
    f_max, f_min = max(kernel_sizes), min(kernel_sizes)
    d = conv_params[0][0].shape[-1]
    l_out = seq_len + 2 * _PAD - f_min + 1
    l_out_p = _round_up(l_out, 16)

    w_blocks, b_blocks, valid_blocks = [], [], []
    for f, (w, b) in zip(kernel_sizes, conv_params):
        co = w.shape[0]
        wt = jnp.transpose(jnp.asarray(w, jnp.float32), (1, 2, 0))   # (f, D, Co)
        wt = jnp.pad(wt, ((0, f_max - f), (0, 0), (0, 0)))           # zero extra taps
        w_blocks.append(wt)
        b_blocks.append(jnp.asarray(b, jnp.float32))
        valid_blocks.append(jnp.full((co,), seq_len + 2 * _PAD - f + 1, jnp.int32))

    con = sum(w.shape[0] for w, _ in conv_params)
    con_p = _round_up(max(con, 1), 128)
    c = fc_w.shape[0]
    c_p = _round_up(max(c, 1), 128)

    wm = jnp.concatenate(w_blocks, axis=-1).reshape(f_max * d, con)
    wm = jnp.pad(wm, ((0, 0), (0, con_p - con))).astype(jnp.bfloat16)
    bm = jnp.pad(jnp.concatenate(b_blocks), (0, con_p - con)).reshape(1, con_p)

    valid = jnp.pad(jnp.concatenate(valid_blocks), (0, con_p - con))  # padded cols -> 0
    t_idx = jnp.arange(l_out_p, dtype=jnp.int32)[:, None]
    mask = (t_idx < valid[None, :]).astype(jnp.float32)               # (l_out_p, con_p)

    fcw = jnp.asarray(fc_w, jnp.float32).T                            # (con, C)
    fcw = jnp.pad(fcw, ((0, con_p - con), (0, c_p - c)))              # (con_p, c_p)
    fcb = jnp.pad(jnp.asarray(fc_b, jnp.float32), (0, c_p - c)).reshape(1, c_p)
    return wm, bm, mask, fcw, fcb


def textcnn_forward(x, params, kernel_sizes, class_num):
    """x: (B, L, D) float.  params: output of prepare_textcnn_params."""
    wm, bm, mask, fcw, fcb = params
    B, L, D = x.shape
    f_max, f_min = max(kernel_sizes), min(kernel_sizes)
    con_p = wm.shape[1]
    c_p = fcw.shape[1]

    l_out = L + 2 * _PAD - f_min + 1          # longest conv output length
    l_out_p = _round_up(l_out, 16)            # sublane-aligned for bf16 & f32 tiles
    lpad = l_out_p + f_max - 1                # padded sequence rows held in VMEM
    assert mask.shape == (l_out_p, con_p), "params were prepared for a different L"

    TB, B_pad, vmem_limit = _pick_tiling(B, L, D, f_max, l_out_p, lpad, con_p, c_p)

    xb = x.astype(jnp.bfloat16)               # halve the streamed-operand DMA bytes
    if B_pad != B:
        xb = jnp.pad(xb, ((0, B_pad - B), (0, 0), (0, 0)))

    kernel = functools.partial(_textcnn_kernel, f_max=f_max, l_out_p=l_out_p)
    out = pl.pallas_call(
        kernel,
        out_shape=jax.ShapeDtypeStruct((B_pad, c_p), jnp.float32),
        grid=(B_pad // TB,),
        in_specs=[
            pl.BlockSpec((TB, L, D), lambda i: (i, 0, 0)),   # x: batch-tiled
            pl.BlockSpec(wm.shape, lambda i: (0, 0)),        # weights: VMEM-resident
            pl.BlockSpec(bm.shape, lambda i: (0, 0)),
            pl.BlockSpec(mask.shape, lambda i: (0, 0)),
            pl.BlockSpec(fcw.shape, lambda i: (0, 0)),
            pl.BlockSpec(fcb.shape, lambda i: (0, 0)),
        ],
        out_specs=pl.BlockSpec((TB, c_p), lambda i: (i, 0)),
        scratch_shapes=[
            pltpu.VMEM((TB, lpad, D), jnp.bfloat16),          # padded sequence only
        ],
        compiler_params=pltpu.CompilerParams(
            # batch axis is embarrassingly parallel -> shards across v7x's 2 TCs;
            # harmless on v5e/v6e (single TensorCore).
            dimension_semantics=("parallel",),
            vmem_limit_bytes=vmem_limit,
        ),
    )(xb, wm, bm, mask, fcw, fcb)
    return out[:B, :class_num]


def textcnn_reference(x, conv_params, fc_w, fc_b):
    """Pure-JAX (f32) reference mirroring the PyTorch forward (eval mode)."""
    x_pad = jnp.pad(x, ((0, 0), (_PAD, _PAD), (0, 0)))
    feats = []
    for (w, b) in conv_params:          # w: (Co, f, D)
        Co, f, D = w.shape
        l_out = x_pad.shape[1] - f + 1
        y = jnp.zeros((x.shape[0], l_out, Co), jnp.float32)
        for j in range(f):
            y = y + jnp.einsum("bld,cd->blc", x_pad[:, j:j + l_out, :], w[:, j, :])
        y = jax.nn.relu(y + b[None, None, :])
        feats.append(jnp.max(y, axis=1))
    feat = jnp.concatenate(feats, axis=1)
    return feat @ fc_w.T + fc_b


if __name__ == "__main__":
    # Shapes consistent with the module: embed_dim=32, kernel_num(Co)=8,
    # kernel_sizes=(3,4,5), class_num=4, batch=2, seq_len=8.
    B, L, D = 2, 8, 32
    Co = 8
    kernel_sizes = (3, 4, 5)
    class_num = 4

    key = jax.random.PRNGKey(0)
    keys = jax.random.split(key, 2 + 2 * len(kernel_sizes) + 2)

    x = jax.random.normal(keys[0], (B, L, D), jnp.float32)

    conv_params = []
    for i, f in enumerate(kernel_sizes):
        w = 0.1 * jax.random.normal(keys[1 + 2 * i], (Co, f, D), jnp.float32)
        b = 0.1 * jax.random.normal(keys[2 + 2 * i], (Co,), jnp.float32)
        conv_params.append((w, b))

    fc_w = 0.1 * jax.random.normal(keys[-2], (class_num, Co * len(kernel_sizes)),
                                   jnp.float32)
    fc_b = 0.1 * jax.random.normal(keys[-1], (class_num,), jnp.float32)

    params = prepare_textcnn_params(conv_params, fc_w, fc_b, kernel_sizes, seq_len=L)

    fwd = jax.jit(textcnn_forward, static_argnums=(2, 3))
    out = jax.block_until_ready(fwd(x, params, kernel_sizes, class_num))

    ref = textcnn_reference(x, conv_params, fc_w, fc_b)
    assert out.shape == (B, class_num), out.shape
    # bf16 conv operands with f32 accumulation (FC is f32) -> loose-ish tolerance.
    assert jnp.allclose(out, ref, atol=5e-2, rtol=5e-2), (out, ref)

    print("KERNEL_OK")
</pallas_src>

<mosaic_0001>
module attributes {stable_mosaic.version = 11 : i64} {
  func.func @_textcnn_kernel(%arg0: i32, %arg1: memref<2x8x32xbf16, #tpu.memory_space<vmem>>, %arg2: memref<160x128xbf16, #tpu.memory_space<vmem>>, %arg3: memref<1x128xf32, #tpu.memory_space<vmem>>, %arg4: memref<16x128xf32, #tpu.memory_space<vmem>>, %arg5: memref<128x128xf32, #tpu.memory_space<vmem>>, %arg6: memref<1x128xf32, #tpu.memory_space<vmem>>, %arg7: memref<2x128xf32, #tpu.memory_space<vmem>>, %arg8: memref<2x20x32xbf16, #tpu.memory_space<vmem>>) attributes {dimension_semantics = [#tpu.dimension_semantics<parallel>], iteration_bounds = array<i64: 1>, scalar_prefetch = 0 : i64, scratch_operands = 1 : i64, tpu.core_type = #tpu.core_type<tc>, window_params = [{transform_indices = @transform_0, window_bounds = array<i64: 2, 8, 32>}, {pipeline_mode = #tpu.pipeline_mode<synchronous>, transform_indices = @transform_1, window_bounds = array<i64: 160, 128>}, {pipeline_mode = #tpu.pipeline_mode<synchronous>, transform_indices = @transform_2, window_bounds = array<i64: 1, 128>}, {pipeline_mode = #tpu.pipeline_mode<synchronous>, transform_indices = @transform_3, window_bounds = array<i64: 16, 128>}, {pipeline_mode = #tpu.pipeline_mode<synchronous>, transform_indices = @transform_4, window_bounds = array<i64: 128, 128>}, {pipeline_mode = #tpu.pipeline_mode<synchronous>, transform_indices = @transform_5, window_bounds = array<i64: 1, 128>}, {transform_indices = @transform_6, window_bounds = array<i64: 2, 128>}]} {
    %cst = arith.constant 0.000000e+00 : bf16
    %0 = vector.broadcast %cst : bf16 to vector<2x2x32xbf16>
    %c0 = arith.constant 0 : index
    %c0_0 = arith.constant 0 : index
    %c0_1 = arith.constant 0 : index
    %1 = vector.load %arg8[%c0, %c0_0, %c0_1] : memref<2x20x32xbf16, #tpu.memory_space<vmem>>, vector<2x2x32xbf16>
    tpu.vector_store %arg8[%c0, %c0_0, %c0_1], %0 {strides = array<i32>} : memref<2x20x32xbf16, #tpu.memory_space<vmem>>, vector<2x2x32xbf16>,
    %cst_2 = arith.constant 0.000000e+00 : bf16
    %2 = vector.broadcast %cst_2 : bf16 to vector<2x10x32xbf16>
    %c0_3 = arith.constant 0 : index
    %c10 = arith.constant 10 : index
    %c0_4 = arith.constant 0 : index
    %3 = vector.load %arg8[%c0_3, %c10, %c0_4] : memref<2x20x32xbf16, #tpu.memory_space<vmem>>, vector<2x10x32xbf16>
    tpu.vector_store %arg8[%c0_3, %c10, %c0_4], %2 {strides = array<i32>} : memref<2x20x32xbf16, #tpu.memory_space<vmem>>, vector<2x10x32xbf16>,
    %c0_5 = arith.constant 0 : index
    %c0_6 = arith.constant 0 : index
    %c0_7 = arith.constant 0 : index
    %4 = vector.load %arg1[%c0_5, %c0_6, %c0_7] : memref<2x8x32xbf16, #tpu.memory_space<vmem>>, vector<2x8x32xbf16>
    %c0_8 = arith.constant 0 : index
    %c2 = arith.constant 2 : index
    %c0_9 = arith.constant 0 : index
    %5 = vector.load %arg8[%c0_8, %c2, %c0_9] : memref<2x20x32xbf16, #tpu.memory_space<vmem>>, vector<2x8x32xbf16>
    tpu.vector_store %arg8[%c0_8, %c2, %c0_9], %4 {strides = array<i32>} : memref<2x20x32xbf16, #tpu.memory_space<vmem>>, vector<2x8x32xbf16>,
    %cst_10 = arith.constant 0.000000e+00 : f32
    %6 = vector.broadcast %cst_10 : f32 to vector<32x128xf32>
    %c0_11 = arith.constant 0 : index
    %c0_12 = arith.constant 0 : index
    %c0_13 = arith.constant 0 : index
    %7 = vector.load %arg8[%c0_11, %c0_12, %c0_13] : memref<2x20x32xbf16, #tpu.memory_space<vmem>>, vector<2x16x32xbf16>
    %8 = vector.shape_cast %7 : vector<2x16x32xbf16> to vector<32x32xbf16>
    %c0_14 = arith.constant 0 : index
    %c0_15 = arith.constant 0 : index
    %9 = vector.load %arg2[%c0_14, %c0_15] : memref<160x128xbf16, #tpu.memory_space<vmem>>, vector<32x128xbf16>
    %cst_16 = arith.constant dense<0.000000e+00> : vector<32x128xf32>
    %10 = tpu.matmul %8, %9, %cst_16 {dimension_numbers = #tpu.dot_dimension_numbers<[1], [0], [0], [1], [0, 0, 1, 1], [], []>} : vector<32x32xbf16>, vector<32x128xbf16>, vector<32x128xf32> -> vector<32x128xf32>
    %11 = arith.addf %6, %10 : vector<32x128xf32>
    %c0_17 = arith.constant 0 : index
    %c1 = arith.constant 1 : index
    %c0_18 = arith.constant 0 : index
    %12 = vector.load %arg8[%c0_17, %c1, %c0_18] : memref<2x20x32xbf16, #tpu.memory_space<vmem>>, vector<2x16x32xbf16>
    %13 = vector.shape_cast %12 : vector<2x16x32xbf16> to vector<32x32xbf16>
    %c32 = arith.constant 32 : index
    %c0_19 = arith.constant 0 : index
    %14 = vector.load %arg2[%c32, %c0_19] : memref<160x128xbf16, #tpu.memory_space<vmem>>, vector<32x128xbf16>
    %cst_20 = arith.constant dense<0.000000e+00> : vector<32x128xf32>
    %15 = tpu.matmul %13, %14, %cst_20 {dimension_numbers = #tpu.dot_dimension_numbers<[1], [0], [0], [1], [0, 0, 1, 1], [], []>} : vector<32x32xbf16>, vector<32x128xbf16>, vector<32x128xf32> -> vector<32x128xf32>
    %16 = arith.addf %11, %15 : vector<32x128xf32>
    %c0_21 = arith.constant 0 : index
    %c2_22 = arith.constant 2 : index
    %c0_23 = arith.constant 0 : index
    %17 = vector.load %arg8[%c0_21, %c2_22, %c0_23] : memref<2x20x32xbf16, #tpu.memory_space<vmem>>, vector<2x16x32xbf16>
    %18 = vector.shape_cast %17 : vector<2x16x32xbf16> to vector<32x32xbf16>
    %c64 = arith.constant 64 : index
    %c0_24 = arith.constant 0 : index
    %19 = vector.load %arg2[%c64, %c0_24] : memref<160x128xbf16, #tpu.memory_space<vmem>>, vector<32x128xbf16>
    %cst_25 = arith.constant dense<0.000000e+00> : vector<32x128xf32>
    %20 = tpu.matmul %18, %19, %cst_25 {dimension_numbers = #tpu.dot_dimension_numbers<[1], [0], [0], [1], [0, 0, 1, 1], [], []>} : vector<32x32xbf16>, vector<32x128xbf16>, vector<32x128xf32> -> vector<32x128xf32>
    %21 = arith.addf %16, %20 : vector<32x128xf32>
    %c0_26 = arith.constant 0 : index
    %c3 = arith.constant 3 : index
    %c0_27 = arith.constant 0 : index
    %22 = vector.load %arg8[%c0_26, %c3, %c0_27] : memref<2x20x32xbf16, #tpu.memory_space<vmem>>, vector<2x16x32xbf16>
    %23 = vector.shape_cast %22 : vector<2x16x32xbf16> to vector<32x32xbf16>
    %c96 = arith.constant 96 : index
    %c0_28 = arith.constant 0 : index
    %24 = vector.load %arg2[%c96, %c0_28] : memref<160x128xbf16, #tpu.memory_space<vmem>>, vector<32x128xbf16>
    %cst_29 = arith.constant dense<0.000000e+00> : vector<32x128xf32>
    %25 = tpu.matmul %23, %24, %cst_29 {dimension_numbers = #tpu.dot_dimension_numbers<[1], [0], [0], [1], [0, 0, 1, 1], [], []>} : vector<32x32xbf16>, vector<32x128xbf16>, vector<32x128xf32> -> vector<32x128xf32>
    %26 = arith.addf %21, %25 : vector<32x128xf32>
    %c0_30 = arith.constant 0 : index
    %c4 = arith.constant 4 : index
    %c0_31 = arith.constant 0 : index
    %27 = vector.load %arg8[%c0_30, %c4, %c0_31] : memref<2x20x32xbf16, #tpu.memory_space<vmem>>, vector<2x16x32xbf16>
    %28 = vector.shape_cast %27 : vector<2x16x32xbf16> to vector<32x32xbf16>
    %c128 = arith.constant 128 : index
    %c0_32 = arith.constant 0 : index
    %29 = vector.load %arg2[%c128, %c0_32] : memref<160x128xbf16, #tpu.memory_space<vmem>>, vector<32x128xbf16>
    %cst_33 = arith.constant dense<0.000000e+00> : vector<32x128xf32>
    %30 = tpu.matmul %28, %29, %cst_33 {dimension_numbers = #tpu.dot_dimension_numbers<[1], [0], [0], [1], [0, 0, 1, 1], [], []>} : vector<32x32xbf16>, vector<32x128xbf16>, vector<32x128xf32> -> vector<32x128xf32>
    %31 = arith.addf %26, %30 : vector<32x128xf32>
    %32 = vector.shape_cast %31 : vector<32x128xf32> to vector<2x16x128xf32>
    %c0_34 = arith.constant 0 : index
    %c0_35 = arith.constant 0 : index
    %33 = vector.load %arg3[%c0_34, %c0_35] : memref<1x128xf32, #tpu.memory_space<vmem>>, vector<1x128xf32>
    %34 = vector.shape_cast %33 : vector<1x128xf32> to vector<1x1x128xf32>
    %35 = vector.broadcast %34 : vector<1x1x128xf32> to vector<2x16x128xf32>
    %36 = arith.addf %32, %35 : vector<2x16x128xf32>
    %cst_36 = arith.constant 0.000000e+00 : f32
    %37 = vector.broadcast %cst_36 : f32 to vector<2x16x128xf32>
    %38 = arith.maximumf %36, %37 : vector<2x16x128xf32>
    %c0_37 = arith.constant 0 : index
    %c0_38 = arith.constant 0 : index
    %39 = vector.load %arg4[%c0_37, %c0_38] : memref<16x128xf32, #tpu.memory_space<vmem>>, vector<16x128xf32>
    %40 = vector.shape_cast %39 : vector<16x128xf32> to vector<1x16x128xf32>
    %41 = vector.broadcast %40 : vector<1x16x128xf32> to vector<2x16x128xf32>
    %42 = arith.mulf %38, %41 : vector<2x16x128xf32>
    %cst_39 = arith.constant dense<0xFF800000> : vector<2x128xf32>
    %43 = vector.multi_reduction <maximumf>, %42, %cst_39 [1] : vector<2x16x128xf32> to vector<2x128xf32>
    %c0_40 = arith.constant 0 : index
    %c0_41 = arith.constant 0 : index
    %44 = vector.load %arg5[%c0_40, %c0_41] : memref<128x128xf32, #tpu.memory_space<vmem>>, vector<128x128xf32>
    %cst_42 = arith.constant dense<0.000000e+00> : vector<2x128xf32>
    %45 = tpu.matmul %43, %44, %cst_42 {dimension_numbers = #tpu.dot_dimension_numbers<[1], [0], [0], [1], [0, 0, 1, 1], [], []>} : vector<2x128xf32>, vector<128x128xf32>, vector<2x128xf32> -> vector<2x128xf32>
    %c0_43 = arith.constant 0 : index
    %c0_44 = arith.constant 0 : index
    %46 = vector.load %arg6[%c0_43, %c0_44] : memref<1x128xf32, #tpu.memory_space<vmem>>, vector<1x128xf32>
    %47 = vector.broadcast %46 : vector<1x128xf32> to vector<2x128xf32>
    %48 = arith.addf %45, %47 : vector<2x128xf32>
    %c0_45 = arith.constant 0 : index
    %c0_46 = arith.constant 0 : index
    %49 = vector.load %arg7[%c0_45, %c0_46] : memref<2x128xf32, #tpu.memory_space<vmem>>, vector<2x128xf32>
    tpu.vector_store %arg7[%c0_45, %c0_46], %48 {strides = array<i32>} : memref<2x128xf32, #tpu.memory_space<vmem>>, vector<2x128xf32>,
    return
  }
  func.func @transform_0(%arg0: i32) -> (i32, i32, i32) {
    %c0_i32 = arith.constant 0 : i32
    %c0_i32_0 = arith.constant 0 : i32
    %c0_i32_1 = arith.constant 0 : i32
    return %arg0, %c0_i32, %c0_i32_0 : i32, i32, i32
  }
  func.func @transform_1(%arg0: i32) -> (i32, i32) {
    %c0_i32 = arith.constant 0 : i32
    %c0_i32_0 = arith.constant 0 : i32
    %c0_i32_1 = arith.constant 0 : i32
    return %c0_i32, %c0_i32_0 : i32, i32
  }
  func.func @transform_2(%arg0: i32) -> (i32, i32) {
    %c0_i32 = arith.constant 0 : i32
    %c0_i32_0 = arith.constant 0 : i32
    %c0_i32_1 = arith.constant 0 : i32
    return %c0_i32, %c0_i32_0 : i32, i32
  }
  func.func @transform_3(%arg0: i32) -> (i32, i32) {
    %c0_i32 = arith.constant 0 : i32
    %c0_i32_0 = arith.constant 0 : i32
    %c0_i32_1 = arith.constant 0 : i32
    return %c0_i32, %c0_i32_0 : i32, i32
  }
  func.func @transform_4(%arg0: i32) -> (i32, i32) {
    %c0_i32 = arith.constant 0 : i32
    %c0_i32_0 = arith.constant 0 : i32
    %c0_i32_1 = arith.constant 0 : i32
    return %c0_i32, %c0_i32_0 : i32, i32
  }
  func.func @transform_5(%arg0: i32) -> (i32, i32) {
    %c0_i32 = arith.constant 0 : i32
    %c0_i32_0 = arith.constant 0 : i32
    %c0_i32_1 = arith.constant 0 : i32
    return %c0_i32, %c0_i32_0 : i32, i32
  }
  func.func @transform_6(%arg0: i32) -> (i32, i32) {
    %c0_i32 = arith.constant 0 : i32
    %c0_i32_0 = arith.constant 0 : i32
    return %arg0, %c0_i32 : i32, i32
  }
}

</mosaic_0001>

<llo_original>
// kernel: textcnn_forward.1
$region0: #{textcnn_forward.1}
  #allocation0 [shape = 'u32[]', space=smem, size = 0x4, offset = 0x4, fixed_abs, tag = 'smem constant byte address 0x4 - core index']
  #allocation1 [shape = 'u32[144,128]{1,0:T(1,128)}', space=vmem, size = 0x12000, scoped, tag = 'internal scratch']
  #allocation2 [shape = 'bf16[2,20,32]{2,1,0:T(8,128)(2,1)}', space=vmem, size = 0x3000, scoped, tag = 'scratch operand']
  %s0 = inlined_call_operand.vmem [shape: bf16[2,8,32], index: 0, kind: input, shape index: {}]
  %s1 = inlined_call_operand.hbm [shape: bf16[160,128], index: 1, kind: input, shape index: {}]
  %s2 = inlined_call_operand.vmem [shape: f32[1,128], index: 2, kind: input, shape index: {}]
  %s3 = inlined_call_operand.vmem [shape: f32[16,128], index: 3, kind: input, shape index: {}]
  %s4 = inlined_call_operand.hbm [shape: f32[128,128], index: 4, kind: input, shape index: {}]
  %s5 = inlined_call_operand.vmem [shape: f32[1,128], index: 5, kind: input, shape index: {}]
  %s6 = inlined_call_operand.hbm [shape: f32[2,128], index: 6, kind: output, shape index: {}]
  %s7 = sld [smem:[#allocation0]]
  $region42: #{textcnn_forward.1} parent=0
    _
  %s9 = ssub.s32 1, %s7
  %s10 = scalar_select 0, %s9, %s7
  $region1: #{textcnn_forward.1} parent=0
    #allocation3 [shape = 'u8[40960]{0}', space=vmem, size = 0xa000, scoped, tag = 'input window, operand 1, single buffered']
    #allocation4 [shape = 's32[1]{0}', space=sflag, size = 0x4, scoped, tag = 'scoped memory for textcnn_forward.1']
    #allocation5 [shape = 's32[1]{0}', space=sflag, size = 0x4, scoped, tag = 'scoped memory for textcnn_forward.1']
    #allocation6 [shape = 'u8[65536]{0}', space=vmem, size = 0x10000, scoped, tag = 'input window, operand 4, single buffered']
    #allocation7 [shape = 's32[1]{0}', space=sflag, size = 0x4, scoped, tag = 'scoped memory for textcnn_forward.1']
    #allocation8 [shape = 'u8[1024]{0}', space=vmem, size = 0x400, scoped, tag = 'output window, operand 0, single buffered']
    %11 = vsyncpa [#allocation4], 0
    %12 = vsyncpa [#allocation7], 0
    %13 = vsyncpa [#allocation5], 0
    // Predicated region
    $region2: #{textcnn_forward.1} parent=1 // pred_check
      _
    $region3: #{textcnn_forward.1} parent=1 // pred_check_branch
      %15 = sbr.rel (0) target = $region5
    $region4: #{textcnn_forward.1} parent=1 // pred_region
      _
    $region5: #{textcnn_forward.1} parent=1 // pred_fallthru
      _
    // Predicated region
    $region6: #{textcnn_forward.1} parent=1 // pred_check
      _
    $region7: #{textcnn_forward.1} parent=1 // pred_check_branch
      %17 = sbr.rel (0) target = $region9
    $region8: #{textcnn_forward.1} parent=1 // pred_region
      %s19 = ssub.s32 1280, 1280
      %20 = vsyncadd [#allocation4], %s19
      %s21 = sshll.u32 [#allocation3], 4
      %s22 = int_to_ptr.vmem [resolvable:$true] %s21
      %27 = dma.hbm_to_vmem [thread:$0]  %s1, 1280, %s22, [#allocation4], 64, 64, 4
    $region9: #{textcnn_forward.1} parent=1 // pred_fallthru
      _
    // Predicated region
    $region10: #{textcnn_forward.1} parent=1 // pred_check
      _
    $region11: #{textcnn_forward.1} parent=1 // pred_check_branch
      %29 = sbr.rel (0) target = $region13
    $region12: #{textcnn_forward.1} parent=1 // pred_region
      _
    $region13: #{textcnn_forward.1} parent=1 // pred_fallthru
      _
    // Predicated region
    $region14: #{textcnn_forward.1} parent=1 // pred_check
      _
    $region15: #{textcnn_forward.1} parent=1 // pred_check_branch
      %31 = sbr.rel (0) target = $region17
    $region16: #{textcnn_forward.1} parent=1 // pred_region
      _
    $region17: #{textcnn_forward.1} parent=1 // pred_fallthru
      _
    // Predicated region
    $region18: #{textcnn_forward.1} parent=1 // pred_check
      _
    $region19: #{textcnn_forward.1} parent=1 // pred_check_branch
      %33 = sbr.rel (0) target = $region21
    $region20: #{textcnn_forward.1} parent=1 // pred_region
      %s35 = ssub.s32 2048, 2048
      %36 = vsyncadd [#allocation7], %s35
      %s37 = sshll.u32 [#allocation6], 4
      %s38 = int_to_ptr.vmem [resolvable:$true] %s37
      %43 = dma.hbm_to_vmem [thread:$0]  %s4, 2048, %s38, [#allocation7], 128, 128, 8
    $region21: #{textcnn_forward.1} parent=1 // pred_fallthru
      _
    // Predicated region
    $region22: #{textcnn_forward.1} parent=1 // pred_check
      _
    $region23: #{textcnn_forward.1} parent=1 // pred_check_branch
      %45 = sbr.rel (0) target = $region25
    $region24: #{textcnn_forward.1} parent=1 // pred_region
      _
    $region25: #{textcnn_forward.1} parent=1 // pred_fallthru
      _
    // Predicated region
    $region26: #{textcnn_forward.1} parent=1 // pred_check
      _
    $region27: #{textcnn_forward.1} parent=1 // pred_check_branch
      %47 = sbr.rel (0) target = $region29
    $region28: #{textcnn_forward.1} parent=1 // pred_region
      %48 = dma.done [#allocation4], 1280
    $region29: #{textcnn_forward.1} parent=1 // pred_fallthru
      _
    // Predicated region
    $region30: #{textcnn_forward.1} parent=1 // pred_check
      _
    $region31: #{textcnn_forward.1} parent=1 // pred_check_branch
      %50 = sbr.rel (0) target = $region33
    $region32: #{textcnn_forward.1} parent=1 // pred_region
      %51 = dma.done [#allocation7], 2048
    $region33: #{textcnn_forward.1} parent=1 // pred_fallthru
      _
    %vm53 = vcmask 253952
    %54 = vst.msk [vmem:[#allocation2] sm:$0x1] %vm53, 0
    %55 = vst.msk [vmem:[#allocation2 + $0xc] sm:$0x1] %vm53, 0
    %vm56 = vcmask 257025
    %57 = vst.msk [vmem:[#allocation2 + $0x4] sm:$0xe] %vm56, 0
    %vm58 = vcmask 254976
    %59 = vst.msk [vmem:[#allocation2 + $0x8] sm:$0x3] %vm58, 0
    %60 = vst.msk [vmem:[#allocation2 + $0x10] sm:$0xe] %vm56, 0
    %61 = vst.msk [vmem:[#allocation2 + $0x14] sm:$0x3] %vm58, 0
    %v62 = vld [vmem:[%s0] sm:$0xf]
    %v63 = vld [vmem:[%s0 + $0x4] sm:$0xf]
    %v66 = vrot.slane %v62, 7
    %v67 = vrot.slane %v66, 4
    %v68 = vrot.slane %v63, 7
    %v69 = vrot.slane %v68, 4
    %74 = vst.msk [vmem:[#allocation2] sm:$0xe] %vm56, %v66
    %75 = vst.msk [vmem:[#allocation2 + $0x4] sm:$0x1] %vm53, %v67
    %76 = vst.msk [vmem:[#allocation2 + $0xc] sm:$0xe] %vm56, %v68
    %77 = vst.msk [vmem:[#allocation2 + $0x10] sm:$0x1] %vm53, %v69
    %v78 = vld [vmem:[#allocation2] sm:$0xf]
    %v79 = vld [vmem:[#allocation2 + $0x4] sm:$0xf]
    %v80 = vld [vmem:[#allocation2 + $0xc] sm:$0xf]
    %v81 = vld [vmem:[#allocation2 + $0x10] sm:$0xf]
    %v82 = vld [vmem:[#allocation3] sm:$0xf]
    %v83 = vld [vmem:[#allocation3 + $0x4] sm:$0xf]
    %v84 = vld [vmem:[#allocation3 + $0x8] sm:$0xf]
    %v85 = vld [vmem:[#allocation3 + $0xc] sm:$0xf]
    %v86 = vld [vmem:[#allocation2 + $0x8] sm:$0x1]
    %v87 = vld [vmem:[#allocation2 + $0x14] sm:$0x1]
    %vm88 = vsmask.f32 3328
    %vm89 = vsmask.f32 7440
    %vm90 = vmor %vm88, %vm89
    %v92 = vshrl.u32 %v78, 16
    %v94 = vrot.slane %v92, 4
    %v95 = vshll.u32 %v78, 16
    %v97 = vrot.slane %v95, 5
    %v98 = vor.u32 %v94, %v97
    %v99 = vrot.slane %v98, 4
    %v101 = vshll.u32 %v79, 16
    %v103 = vrot.slane %v101, 5
    %v104 = vsel %vm90, %v99, %v103
    %v105 = vshrl.u32 %v79, 16
    %v107 = vrot.slane %v105, 4
    %v108 = vor.u32 %v107, %v103
    %v109 = vrot.slane %v108, 4
    %v111 = vshll.u32 %v86, 16
    %v113 = vrot.slane %v111, 5
    %v114 = vsel %vm90, %v109, %v113
    %v116 = vshrl.u32 %v80, 16
    %v118 = vrot.slane %v116, 4
    %v119 = vshll.u32 %v80, 16
    %v121 = vrot.slane %v119, 5
    %v122 = vor.u32 %v118, %v121
    %v123 = vrot.slane %v122, 4
    %v125 = vshll.u32 %v81, 16
    %v127 = vrot.slane %v125, 5
    %v128 = vsel %vm90, %v123, %v127
    %v129 = vshrl.u32 %v81, 16
    %v131 = vrot.slane %v129, 4
    %v132 = vor.u32 %v131, %v127
    %v133 = vrot.slane %v132, 4
    %v135 = vshll.u32 %v87, 16
    %v137 = vrot.slane %v135, 5
    %v138 = vsel %vm90, %v133, %v137
    %v139 = vld [vmem:[#allocation3 + $0x10] sm:$0xf]
    %v140 = vld [vmem:[#allocation3 + $0x14] sm:$0xf]
    %v141 = vld [vmem:[#allocation3 + $0x18] sm:$0xf]
    %v142 = vld [vmem:[#allocation3 + $0x1c] sm:$0xf]
    %v143 = vunpack.c.l.b16 %v104
    %v144 = vunpack.c.l.b16 %v114
    %v145 = vunpack.c.l.b16 %v128
    %v146 = vunpack.c.l.b16 %v138
    %v147 = vpack.c.b16 %v144, %v143
    %v148 = vpack.c.b16 %v146, %v145
    %v153 = vunpack.c.l.b16 %v139
    %v154 = vunpack.c.l.b16 %v140
    %v155 = vunpack.c.l.b16 %v141
    %v156 = vunpack.c.l.b16 %v142
    %v157 = vpack.c.b16 %v154, %v153
    %v158 = vpack.c.b16 %v156, %v155
    %vm161 = vcmask 261120
    %v163 = vsel %vm161, %v147, 0
    %v166 = vsel %vm161, %v148, 0
    %168 = vmatprep.subr.bf16.mxu0 0
    %169 = vmatpush1.bf16.msra.mxu0 0
    %170 = vmatprep.subr.bf16.mxu0 0
    %171 = vmatpush1.bf16.msra.mxu0 0
    %172 = vmatprep.subr.bf16.mxu0 0
    %173 = vmatpush1.bf16.msra.mxu0 0
    %174 = vmatprep.subr.bf16.mxu0 0
    %175 = vmatpush1.bf16.msra.mxu0 0
    %176 = vmatprep.subr.bf16.mxu0 0
    %177 = vmatpush1.bf16.msra.mxu0 0
    %178 = vmatprep.subr.bf16.mxu0 0
    %179 = vmatpush1.bf16.msra.mxu0 0
    %180 = vmatprep.subr.bf16.mxu0 0
    %181 = vmatpush1.bf16.msra.mxu0 %v158
    %182 = vmatprep.subr.bf16.mxu0 0
    %183 = vmatpush1.bf16.msra.mxu0 %v157
    %184 = vmatprep.subr.bf16.mxu0 0
    %185 = vmatpush2.bf16.msra.mxu0 0
    %186 = vmatprep.subr.bf16.mxu0 0
    %187 = vmatpush2.bf16.msra.mxu0 0
    %188 = vmatprep.subr.bf16.mxu0 0
    %189 = vmatpush2.bf16.msra.mxu0 0
    %190 = vmatprep.subr.bf16.mxu0 0
    %191 = vmatpush2.bf16.msra.mxu0 0
    %192 = vmatprep.subr.bf16.mxu0 0
    %193 = vmatpush2.bf16.msra.mxu0 0
    %194 = vmatprep.subr.bf16.mxu0 0
    %195 = vmatpush2.bf16.msra.mxu0 0
    %196 = vmatprep.subr.bf16.mxu0 0
    %197 = vmatpush2.bf16.msra.mxu0 0
    %198 = vmatprep.subr.bf16.mxu0 0
    %199 = vmatpush2.bf16.msra.mxu0 0
    %200 = vmatprep.mubr.bf16.mxu0 0
    %201 = vmatmul.mubr.bf16.gmra.mxu0 %v163
    %v202 = vpop.f32.mrf.mxu0
    %v203 = vadd.f32 0.0, %v202
    %v204 = vpop.f32.mrf.mxu0
    %v205 = vpop.f32.mrf.mxu0
    %v206 = vadd.f32 0.0, %v205
    %v207 = vpop.f32.mrf.mxu0
    %208 = vmatprep.mubr.bf16.mxu0 0
    %209 = vmatmul.mubr.bf16.gmra.mxu0 %v166
    %v210 = vpop.f32.mrf.mxu0
    %v211 = vadd.f32 0.0, %v210
    %v212 = vpop.f32.mrf.mxu0
    %v213 = vpop.f32.mrf.mxu0
    %v214 = vadd.f32 0.0, %v213
    %v215 = vpop.f32.mrf.mxu0
    %216 = vdwg.mxu0
    %v221 = vunpack.c.l.b16 %v78
    %v222 = vunpack.c.l.b16 %v79
    %v223 = vunpack.c.l.b16 %v80
    %v224 = vunpack.c.l.b16 %v81
    %v225 = vpack.c.b16 %v222, %v221
    %v226 = vpack.c.b16 %v224, %v223
    %v231 = vunpack.c.l.b16 %v82
    %v232 = vunpack.c.l.b16 %v83
    %v233 = vunpack.c.l.b16 %v84
    %v234 = vunpack.c.l.b16 %v85
    %v235 = vpack.c.b16 %v232, %v231
    %v236 = vpack.c.b16 %v234, %v233
    %v240 = vsel %vm161, %v225, 0
    %v243 = vsel %vm161, %v226, 0
    %245 = vmatprep.subr.bf16.mxu0 0
    %246 = vmatpush1.bf16.msra.mxu0 0
    %247 = vmatprep.subr.bf16.mxu0 0
    %248 = vmatpush1.bf16.msra.mxu0 0
    %249 = vmatprep.subr.bf16.mxu0 0
    %250 = vmatpush1.bf16.msra.mxu0 0
    %251 = vmatprep.subr.bf16.mxu0 0
    %252 = vmatpush1.bf16.msra.mxu0 0
    %253 = vmatprep.subr.bf16.mxu0 0
    %254 = vmatpush1.bf16.msra.mxu0 0
    %255 = vmatprep.subr.bf16.mxu0 0
    %256 = vmatpush1.bf16.msra.mxu0 0
    %257 = vmatprep.subr.bf16.mxu0 0
    %258 = vmatpush1.bf16.msra.mxu0 %v236
    %259 = vmatprep.subr.bf16.mxu0 0
    %260 = vmatpush1.bf16.msra.mxu0 %v235
    %261 = vmatprep.subr.bf16.mxu0 0
    %262 = vmatpush2.bf16.msra.mxu0 0
    %263 = vmatprep.subr.bf16.mxu0 0
    %264 = vmatpush2.bf16.msra.mxu0 0
    %265 = vmatprep.subr.bf16.mxu0 0
    %266 = vmatpush2.bf16.msra.mxu0 0
    %267 = vmatprep.subr.bf16.mxu0 0
    %268 = vmatpush2.bf16.msra.mxu0 0
    %269 = vmatprep.subr.bf16.mxu0 0
    %270 = vmatpush2.bf16.msra.mxu0 0
    %271 = vmatprep.subr.bf16.mxu0 0
    %272 = vmatpush2.bf16.msra.mxu0 0
    %273 = vmatprep.subr.bf16.mxu0 0
    %274 = vmatpush2.bf16.msra.mxu0 0
    %275 = vmatprep.subr.bf16.mxu0 0
    %276 = vmatpush2.bf16.msra.mxu0 0
    %277 = vmatprep.mubr.bf16.mxu0 0
    %278 = vmatmul.mubr.bf16.gmra.mxu0 %v240
    %v279 = vpop.f32.mrf.mxu0
    %v280 = vadd.f32 %v203, %v279
    %v281 = vpop.f32.mrf.mxu0
    %v282 = vpop.f32.mrf.mxu0
    %v283 = vadd.f32 %v206, %v282
    %v284 = vpop.f32.mrf.mxu0
    %285 = vmatprep.mubr.bf16.mxu0 0
    %286 = vmatmul.mubr.bf16.gmra.mxu0 %v243
    %v287 = vpop.f32.mrf.mxu0
    %v288 = vadd.f32 %v211, %v287
    %v289 = vpop.f32.mrf.mxu0
    %v290 = vpop.f32.mrf.mxu0
    %v291 = vadd.f32 %v214, %v290
    %v292 = vpop.f32.mrf.mxu0
    %293 = vdwg.mxu0
    %v294 = vld [vmem:[#allocation2] sm:$0xe]
    %v295 = vld [vmem:[#allocation2 + $0xc] sm:$0xe]
    %vm300 = vcmask 1042432
    %vm301 = vcmask 1046532
    %vm302 = vmor %vm300, %vm301
    %v303 = vrot.slane %v294, 5
    %v304 = vrot.slane %v303, 4
    %v305 = vrot.slane %v79, 5
    %v306 = vsel %vm302, %v304, %v305
    %v307 = vrot.slane %v305, 4
    %v308 = vrot.slane %v86, 5
    %v309 = vsel %vm302, %v307, %v308
    %v310 = vrot.slane %v295, 5
    %v311 = vrot.slane %v310, 4
    %v312 = vrot.slane %v81, 5
    %v313 = vsel %vm302, %v311, %v312
    %v314 = vrot.slane %v312, 4
    %v315 = vrot.slane %v87, 5
    %v316 = vsel %vm302, %v314, %v315
    %v317 = vld [vmem:[#allocation3 + $0x20] sm:$0xf]
    %v318 = vld [vmem:[#allocation3 + $0x24] sm:$0xf]
    %v319 = vld [vmem:[#allocation3 + $0x28] sm:$0xf]
    %v320 = vld [vmem:[#allocation3 + $0x2c] sm:$0xf]
    %v321 = vunpack.c.l.b16 %v306
    %v322 = vunpack.c.l.b16 %v309
    %v323 = vunpack.c.l.b16 %v313
    %v324 = vunpack.c.l.b16 %v316
    %v325 = vpack.c.b16 %v322, %v321
    %v326 = vpack.c.b16 %v324, %v323
    %v331 = vunpack.c.l.b16 %v317
    %v332 = vunpack.c.l.b16 %v318
    %v333 = vunpack.c.l.b16 %v319
    %v334 = vunpack.c.l.b16 %v320
    %v335 = vpack.c.b16 %v332, %v331
    %v336 = vpack.c.b16 %v334, %v333
    %v340 = vsel %vm161, %v325, 0
    %v343 = vsel %vm161, %v326, 0
    %345 = vmatprep.subr.bf16.mxu0 0
    %346 = vmatpush1.bf16.msra.mxu0 0
    %347 = vmatprep.subr.bf16.mxu0 0
    %348 = vmatpush1.bf16.msra.mxu0 0
    %349 = vmatprep.subr.bf16.mxu0 0
    %350 = vmatpush1.bf16.msra.mxu0 0
    %351 = vmatprep.subr.bf16.mxu0 0
    %352 = vmatpush1.bf16.msra.mxu0 0
    %353 = vmatprep.subr.bf16.mxu0 0
    %354 = vmatpush1.bf16.msra.mxu0 0
    %355 = vmatprep.subr.bf16.mxu0 0
    %356 = vmatpush1.bf16.msra.mxu0 0
    %357 = vmatprep.subr.bf16.mxu0 0
    %358 = vmatpush1.bf16.msra.mxu0 %v336
    %359 = vmatprep.subr.bf16.mxu0 0
    %360 = vmatpush1.bf16.msra.mxu0 %v335
    %361 = vmatprep.subr.bf16.mxu0 0
    %362 = vmatpush2.bf16.msra.mxu0 0
    %363 = vmatprep.subr.bf16.mxu0 0
    %364 = vmatpush2.bf16.msra.mxu0 0
    %365 = vmatprep.subr.bf16.mxu0 0
    %366 = vmatpush2.bf16.msra.mxu0 0
    %367 = vmatprep.subr.bf16.mxu0 0
    %368 = vmatpush2.bf16.msra.mxu0 0
    %369 = vmatprep.subr.bf16.mxu0 0
    %370 = vmatpush2.bf16.msra.mxu0 0
    %371 = vmatprep.subr.bf16.mxu0 0
    %372 = vmatpush2.bf16.msra.mxu0 0
    %373 = vmatprep.subr.bf16.mxu0 0
    %374 = vmatpush2.bf16.msra.mxu0 0
    %375 = vmatprep.subr.bf16.mxu0 0
    %376 = vmatpush2.bf16.msra.mxu0 0
    %377 = vmatprep.mubr.bf16.mxu0 0
    %378 = vmatmul.mubr.bf16.gmra.mxu0 %v340
    %v379 = vpop.f32.mrf.mxu0
    %v380 = vadd.f32 0.0, %v379
    %v381 = vpop.f32.mrf.mxu0
    %v382 = vpop.f32.mrf.mxu0
    %v383 = vadd.f32 0.0, %v382
    %v384 = vpop.f32.mrf.mxu0
    %385 = vmatprep.mubr.bf16.mxu0 0
    %386 = vmatmul.mubr.bf16.gmra.mxu0 %v343
    %v387 = vpop.f32.mrf.mxu0
    %v388 = vadd.f32 0.0, %v387
    %v389 = vpop.f32.mrf.mxu0
    %v390 = vpop.f32.mrf.mxu0
    %v391 = vadd.f32 0.0, %v390
    %v392 = vpop.f32.mrf.mxu0
    %393 = vdwg.mxu0
    %v394 = vadd.f32 %v280, %v380
    %v395 = vadd.f32 %v283, %v383
    %v396 = vadd.f32 %v288, %v388
    %v397 = vadd.f32 %v291, %v391
    %v398 = vld [vmem:[#allocation2 + $0x8] sm:$0x3]
    %v399 = vld [vmem:[#allocation2 + $0x14] sm:$0x3]
    %vm400 = vsmask.f32 2304
    %vm401 = vsmask.f32 6416
    %vm402 = vmor %vm400, %vm401
    %v404 = vshrl.u32 %v294, 16
    %v406 = vrot.slane %v404, 5
    %v407 = vshll.u32 %v294, 16
    %v409 = vrot.slane %v407, 6
    %v410 = vor.u32 %v406, %v409
    %v411 = vrot.slane %v410, 4
    %v412 = vrot.slane %v105, 5
    %v413 = vrot.slane %v101, 6
    %v414 = vor.u32 %v412, %v413
    %v415 = vsel %vm402, %v411, %v414
    %v416 = vrot.slane %v414, 4
    %v418 = vshrl.u32 %v398, 16
    %v420 = vrot.slane %v418, 5
    %v421 = vshll.u32 %v398, 16
    %v423 = vrot.slane %v421, 6
    %v424 = vor.u32 %v420, %v423
    %v425 = vsel %vm402, %v416, %v424
    %v427 = vshrl.u32 %v295, 16
    %v429 = vrot.slane %v427, 5
    %v430 = vshll.u32 %v295, 16
    %v432 = vrot.slane %v430, 6
    %v433 = vor.u32 %v429, %v432
    %v434 = vrot.slane %v433, 4
    %v435 = vrot.slane %v129, 5
    %v436 = vrot.slane %v125, 6
    %v437 = vor.u32 %v435, %v436
    %v438 = vsel %vm402, %v434, %v437
    %v439 = vrot.slane %v437, 4
    %v441 = vshrl.u32 %v399, 16
    %v443 = vrot.slane %v441, 5
    %v444 = vshll.u32 %v399, 16
    %v446 = vrot.slane %v444, 6
    %v447 = vor.u32 %v443, %v446
    %v448 = vsel %vm402, %v439, %v447
    %v449 = vld [vmem:[#allocation3 + $0x30] sm:$0xf]
    %v450 = vld [vmem:[#allocation3 + $0x34] sm:$0xf]
    %v451 = vld [vmem:[#allocation3 + $0x38] sm:$0xf]
    %v452 = vld [vmem:[#allocation3 + $0x3c] sm:$0xf]
    %v453 = vunpack.c.l.b16 %v415
    %v454 = vunpack.c.l.b16 %v425
    %v455 = vunpack.c.l.b16 %v438
    %v456 = vunpack.c.l.b16 %v448
    %v457 = vpack.c.b16 %v454, %v453
    %v458 = vpack.c.b16 %v456, %v455
    %v463 = vunpack.c.l.b16 %v449
    %v464 = vunpack.c.l.b16 %v450
    %v465 = vunpack.c.l.b16 %v451
    %v466 = vunpack.c.l.b16 %v452
    %v467 = vpack.c.b16 %v464, %v463
    %v468 = vpack.c.b16 %v466, %v465
    %v472 = vsel %vm161, %v457, 0
    %v475 = vsel %vm161, %v458, 0
    %477 = vmatprep.subr.bf16.mxu0 0
    %478 = vmatpush1.bf16.msra.mxu0 0
    %479 = vmatprep.subr.bf16.mxu0 0
    %480 = vmatpush1.bf16.msra.mxu0 0
    %481 = vmatprep.subr.bf16.mxu0 0
    %482 = vmatpush1.bf16.msra.mxu0 0
    %483 = vmatprep.subr.bf16.mxu0 0
    %484 = vmatpush1.bf16.msra.mxu0 0
    %485 = vmatprep.subr.bf16.mxu0 0
    %486 = vmatpush1.bf16.msra.mxu0 0
    %487 = vmatprep.subr.bf16.mxu0 0
    %488 = vmatpush1.bf16.msra.mxu0 0
    %489 = vmatprep.subr.bf16.mxu0 0
    %490 = vmatpush1.bf16.msra.mxu0 %v468
    %491 = vmatprep.subr.bf16.mxu0 0
    %492 = vmatpush1.bf16.msra.mxu0 %v467
    %493 = vmatprep.subr.bf16.mxu0 0
    %494 = vmatpush2.bf16.msra.mxu0 0
    %495 = vmatprep.subr.bf16.mxu0 0
    %496 = vmatpush2.bf16.msra.mxu0 0
    %497 = vmatprep.subr.bf16.mxu0 0
    %498 = vmatpush2.bf16.msra.mxu0 0
    %499 = vmatprep.subr.bf16.mxu0 0
    %500 = vmatpush2.bf16.msra.mxu0 0
    %501 = vmatprep.subr.bf16.mxu0 0
    %502 = vmatpush2.bf16.msra.mxu0 0
    %503 = vmatprep.subr.bf16.mxu0 0
    %504 = vmatpush2.bf16.msra.mxu0 0
    %505 = vmatprep.subr.bf16.mxu0 0
    %506 = vmatpush2.bf16.msra.mxu0 0
    %507 = vmatprep.subr.bf16.mxu0 0
    %508 = vmatpush2.bf16.msra.mxu0 0
    %509 = vmatprep.mubr.bf16.mxu0 0
    %510 = vmatmul.mubr.bf16.gmra.mxu0 %v472
    %v511 = vpop.f32.mrf.mxu0
    %v512 = vadd.f32 0.0, %v511
    %v513 = vpop.f32.mrf.mxu0
    %v514 = vpop.f32.mrf.mxu0
    %v515 = vadd.f32 0.0, %v514
    %v516 = vpop.f32.mrf.mxu0
    %517 = vmatprep.mubr.bf16.mxu0 0
    %518 = vmatmul.mubr.bf16.gmra.mxu0 %v475
    %v519 = vpop.f32.mrf.mxu0
    %v520 = vadd.f32 0.0, %v519
    %v521 = vpop.f32.mrf.mxu0
    %v522 = vpop.f32.mrf.mxu0
    %v523 = vadd.f32 0.0, %v522
    %v524 = vpop.f32.mrf.mxu0
    %525 = vdwg.mxu0
    %v526 = vadd.f32 %v394, %v512
    %v527 = vadd.f32 %v395, %v515
    %v528 = vadd.f32 %v396, %v520
    %v529 = vadd.f32 %v397, %v523
    %v530 = vld [vmem:[#allocation2] sm:$0xc]
    %v531 = vld [vmem:[#allocation2 + $0xc] sm:$0xc]
    %vm536 = vcmask 1041408
    %vm537 = vcmask 1045508
    %vm538 = vmor %vm536, %vm537
    %v539 = vrot.slane %v530, 6
    %v540 = vrot.slane %v539, 4
    %v541 = vrot.slane %v79, 6
    %v542 = vsel %vm538, %v540, %v541
    %v543 = vrot.slane %v541, 4
    %v544 = vrot.slane %v398, 6
    %v545 = vsel %vm538, %v543, %v544
    %v546 = vrot.slane %v531, 6
    %v547 = vrot.slane %v546, 4
    %v548 = vrot.slane %v81, 6
    %v549 = vsel %vm538, %v547, %v548
    %v550 = vrot.slane %v548, 4
    %v551 = vrot.slane %v399, 6
    %v552 = vsel %vm538, %v550, %v551
    %v553 = vld [vmem:[#allocation3 + $0x40] sm:$0xf]
    %v554 = vld [vmem:[#allocation3 + $0x44] sm:$0xf]
    %v555 = vld [vmem:[#allocation3 + $0x48] sm:$0xf]
    %v556 = vld [vmem:[#allocation3 + $0x4c] sm:$0xf]
    %v557 = vunpack.c.l.b16 %v542
    %v558 = vunpack.c.l.b16 %v545
    %v559 = vunpack.c.l.b16 %v549
    %v560 = vunpack.c.l.b16 %v552
    %v561 = vpack.c.b16 %v558, %v557
    %v562 = vpack.c.b16 %v560, %v559
    %v567 = vunpack.c.l.b16 %v553
    %v568 = vunpack.c.l.b16 %v554
    %v569 = vunpack.c.l.b16 %v555
    %v570 = vunpack.c.l.b16 %v556
    %v571 = vpack.c.b16 %v568, %v567
    %v572 = vpack.c.b16 %v570, %v569
    %v576 = vsel %vm161, %v561, 0
    %v579 = vsel %vm161, %v562, 0
    %581 = vmatprep.subr.bf16.mxu0 0
    %582 = vmatpush1.bf16.msra.mxu0 0
    %583 = vmatprep.subr.bf16.mxu0 0
    %584 = vmatpush1.bf16.msra.mxu0 0
    %585 = vmatprep.subr.bf16.mxu0 0
    %586 = vmatpush1.bf16.msra.mxu0 0
    %587 = vmatprep.subr.bf16.mxu0 0
    %588 = vmatpush1.bf16.msra.mxu0 0
    %589 = vmatprep.subr.bf16.mxu0 0
    %590 = vmatpush1.bf16.msra.mxu0 0
    %591 = vmatprep.subr.bf16.mxu0 0
    %592 = vmatpush1.bf16.msra.mxu0 0
    %593 = vmatprep.subr.bf16.mxu0 0
    %594 = vmatpush1.bf16.msra.mxu0 %v572
    %595 = vmatprep.subr.bf16.mxu0 0
    %596 = vmatpush1.bf16.msra.mxu0 %v571
    %597 = vmatprep.subr.bf16.mxu0 0
    %598 = vmatpush2.bf16.msra.mxu0 0
    %599 = vmatprep.subr.bf16.mxu0 0
    %600 = vmatpush2.bf16.msra.mxu0 0
    %601 = vmatprep.subr.bf16.mxu0 0
    %602 = vmatpush2.bf16.msra.mxu0 0
    %603 = vmatprep.subr.bf16.mxu0 0
    %604 = vmatpush2.bf16.msra.mxu0 0
    %605 = vmatprep.subr.bf16.mxu0 0
    %606 = vmatpush2.bf16.msra.mxu0 0
    %607 = vmatprep.subr.bf16.mxu0 0
    %608 = vmatpush2.bf16.msra.mxu0 0
    %609 = vmatprep.subr.bf16.mxu0 0
    %610 = vmatpush2.bf16.msra.mxu0 0
    %611 = vmatprep.subr.bf16.mxu0 0
    %612 = vmatpush2.bf16.msra.mxu0 0
    %613 = vmatprep.mubr.bf16.mxu0 0
    %614 = vmatmul.mubr.bf16.gmra.mxu0 %v576
    %v615 = vpop.f32.mrf.mxu0
    %v616 = vadd.f32 0.0, %v615
    %v617 = vpop.f32.mrf.mxu0
    %v618 = vpop.f32.mrf.mxu0
    %v619 = vadd.f32 0.0, %v618
    %v620 = vpop.f32.mrf.mxu0
    %621 = vmatprep.mubr.bf16.mxu0 0
    %622 = vmatmul.mubr.bf16.gmra.mxu0 %v579
    %v623 = vpop.f32.mrf.mxu0
    %v624 = vadd.f32 0.0, %v623
    %v625 = vpop.f32.mrf.mxu0
    %v626 = vpop.f32.mrf.mxu0
    %v627 = vadd.f32 0.0, %v626
    %v628 = vpop.f32.mrf.mxu0
    %629 = vdwg.mxu0
    %v630 = vadd.f32 %v526, %v616
    %v631 = vadd.f32 %v527, %v619
    %v632 = vadd.f32 %v528, %v624
    %v633 = vadd.f32 %v529, %v627
    %v634 = vld [vmem:[%s2] sm:$0x1]
    %v636 = vlaneseq
    %v637 = vshrl.u32 %v636, 7
    %v638 = vsub.s32 0, %v637
    %v639 = vrot.slane %v634, %v638
    %v641 = vadd.f32 %v630, %v639
    %v642 = vadd.f32 %v631, %v639
    %v643 = vadd.f32 %v632, %v639
    %v644 = vadd.f32 %v633, %v639
    %v645 = vmax.f32 %v641, 0.0
    %v646 = vmax.f32 %v642, 0.0
    %v647 = vmax.f32 %v643, 0.0
    %v648 = vmax.f32 %v644, 0.0
    %v649 = vld [vmem:[%s3] sm:$0xff]
    %v650 = vld [vmem:[%s3 + $0x8] sm:$0xff]
    %v651 = vmul.f32 %v645, %v649
    %v652 = vmul.f32 %v646, %v650
    %v653 = vmul.f32 %v647, %v649
    %v654 = vmul.f32 %v648, %v650
    %v655 = vmax.f32 %v651, %v652
    %v656 = vrot.slane %v655, 4
    %v657 = vmax.f32 %v655, %v656
    %v658 = vrot.slane %v657, 2
    %v659 = vmax.f32 %v657, %v658
    %v660 = vrot.slane %v659, 1
    %v661 = vmax.f32 %v659, %v660
    %v662 = vmax.f32 %v653, %v654
    %v663 = vrot.slane %v662, 4
    %v664 = vmax.f32 %v662, %v663
    %v665 = vrot.slane %v664, 2
    %v666 = vmax.f32 %v664, %v665
    %v667 = vrot.slane %v666, 1
    %v668 = vmax.f32 %v666, %v667
    %v669 = vld [vmem:[#allocation6] sm:$0xff]
    %v670 = vld [vmem:[#allocation6 + $0x8] sm:$0xff]
    %v671 = vld [vmem:[#allocation6 + $0x10] sm:$0xff]
    %v672 = vld [vmem:[#allocation6 + $0x18] sm:$0xff]
    %v673 = vld [vmem:[#allocation6 + $0x20] sm:$0xff]
    %v674 = vld [vmem:[#allocation6 + $0x28] sm:$0xff]
    %v675 = vld [vmem:[#allocation6 + $0x30] sm:$0xff]
    %v676 = vld [vmem:[#allocation6 + $0x38] sm:$0xff]
    %v677 = vld [vmem:[#allocation6 + $0x40] sm:$0xff]
    %v678 = vld [vmem:[#allocation6 + $0x48] sm:$0xff]
    %v679 = vld [vmem:[#allocation6 + $0x50] sm:$0xff]
    %v680 = vld [vmem:[#allocation6 + $0x58] sm:$0xff]
    %v681 = vld [vmem:[#allocation6 + $0x60] sm:$0xff]
    %v682 = vld [vmem:[#allocation6 + $0x68] sm:$0xff]
    %v683 = vld [vmem:[#allocation6 + $0x70] sm:$0xff]
    %v684 = vld [vmem:[#allocation6 + $0x78] sm:$0xff]
    %v685 = vld [vmem:[%s5] sm:$0x1]
    %v687 = vlaneseq
    %v688 = vshrl.u32 %v687, 7
    %v689 = vsub.s32 0, %v688
    %v690 = vrot.slane %v685, %v689
    %vm694 = vcmask 1041409
    %v695 = vsel %vm694, %v668, %v661
    %697 = vmatprep.subr.mxu0 0.0
    %698 = vmatpush1.msra.mxu0 %v684
    %699 = vmatprep.subr.mxu0 0.0
    %700 = vmatpush1.msra.mxu0 %v683
    %701 = vmatprep.subr.mxu0 0.0
    %702 = vmatpush1.msra.mxu0 %v682
    %703 = vmatprep.subr.mxu0 0.0
    %704 = vmatpush1.msra.mxu0 %v681
    %705 = vmatprep.subr.mxu0 0.0
    %706 = vmatpush1.msra.mxu0 %v680
    %707 = vmatprep.subr.mxu0 0.0
    %708 = vmatpush1.msra.mxu0 %v679
    %709 = vmatprep.subr.mxu0 0.0
    %710 = vmatpush1.msra.mxu0 %v678
    %711 = vmatprep.subr.mxu0 0.0
    %712 = vmatpush1.msra.mxu0 %v677
    %713 = vmatprep.subr.mxu0 0.0
    %714 = vmatpush1.msra.mxu0 %v676
    %715 = vmatprep.subr.mxu0 0.0
    %716 = vmatpush1.msra.mxu0 %v675
    %717 = vmatprep.subr.mxu0 0.0
    %718 = vmatpush1.msra.mxu0 %v674
    %719 = vmatprep.subr.mxu0 0.0
    %720 = vmatpush1.msra.mxu0 %v673
    %721 = vmatprep.subr.mxu0 0.0
    %722 = vmatpush1.msra.mxu0 %v672
    %723 = vmatprep.subr.mxu0 0.0
    %724 = vmatpush1.msra.mxu0 %v671
    %725 = vmatprep.subr.mxu0 0.0
    %726 = vmatpush1.msra.mxu0 %v670
    %727 = vmatprep.subr.mxu0 0.0
    %728 = vmatpush1.msra.mxu0 %v669
    %729 = vmatprep.subr.mxu0 0.0
    %730 = vmatpush2.msra.mxu0 0.0
    %731 = vmatprep.subr.mxu0 0.0
    %732 = vmatpush2.msra.mxu0 0.0
    %733 = vmatprep.subr.mxu0 0.0
    %734 = vmatpush2.msra.mxu0 0.0
    %735 = vmatprep.subr.mxu0 0.0
    %736 = vmatpush2.msra.mxu0 0.0
    %737 = vmatprep.subr.mxu0 0.0
    %738 = vmatpush2.msra.mxu0 0.0
    %739 = vmatprep.subr.mxu0 0.0
    %740 = vmatpush2.msra.mxu0 0.0
    %741 = vmatprep.subr.mxu0 0.0
    %742 = vmatpush2.msra.mxu0 0.0
    %743 = vmatprep.subr.mxu0 0.0
    %744 = vmatpush2.msra.mxu0 0.0
    %745 = vmatprep.subr.mxu0 0.0
    %746 = vmatpush2.msra.mxu0 0.0
    %747 = vmatprep.subr.mxu0 0.0
    %748 = vmatpush2.msra.mxu0 0.0
    %749 = vmatprep.subr.mxu0 0.0
    %750 = vmatpush2.msra.mxu0 0.0
    %751 = vmatprep.subr.mxu0 0.0
    %752 = vmatpush2.msra.mxu0 0.0
    %753 = vmatprep.subr.mxu0 0.0
    %754 = vmatpush2.msra.mxu0 0.0
    %755 = vmatprep.subr.mxu0 0.0
    %756 = vmatpush2.msra.mxu0 0.0
    %757 = vmatprep.subr.mxu0 0.0
    %758 = vmatpush2.msra.mxu0 0.0
    %759 = vmatprep.subr.mxu0 0.0
    %760 = vmatpush2.msra.mxu0 0.0
    %761 = vmatprep.mubr.f32.mxu0 0.0
    %762 = vmatmul.mubr.f32.gmra.mxu0 %v695
    %v763 = vpop.f32.mrf.mxu0
    %v764 = vadd.f32 %v690, %v763
    %v765 = vpop.f32.mrf.mxu0
    %766 = vdwg.mxu0
    %767 = vst [vmem:[#allocation8] sm:$0x3] %v764
    // Predicated region
    $region34: #{textcnn_forward.1} parent=1 // pred_check
      _
    $region35: #{textcnn_forward.1} parent=1 // pred_check_branch
      %769 = sbr.rel (0) target = $region37
    $region36: #{textcnn_forward.1} parent=1 // pred_region
      %s771 = ssub.s32 32, 32
      %772 = vsyncadd [#allocation5], %s771
      %s774 = sshll.u32 [#allocation8], 4
      %s775 = int_to_ptr.vmem [resolvable:$true] %s774
      %777 = dma.vmem_to_hbm [thread:$0]  %s775, 32, %s6, [#allocation5]
    $region37: #{textcnn_forward.1} parent=1 // pred_fallthru
      _
    // Predicated region
    $region38: #{textcnn_forward.1} parent=1 // pred_check
      _
    $region39: #{textcnn_forward.1} parent=1 // pred_check_branch
      %779 = sbr.rel (0) target = $region41
    $region40: #{textcnn_forward.1} parent=1 // pred_region
      %780 = dma.done [#allocation5], 32
    $region41: #{textcnn_forward.1} parent=1 // pred_fallthru
      _
    %781 = vsyncpa [#allocation4], 1
    %782 = vsyncpa [#allocation7], 1
    %783 = vsyncpa [#allocation5], 1

</llo_original>
